<compile_context>
chip_gen: v7x
topology: tpu7x:2x2x1
jax: 0.10.0
libtpu: 0.0.40
codegen_flags: <defaults>
</compile_context>

<pallas_src>
import functools
import math

import numpy as np
import jax
import jax.numpy as jnp
from jax.experimental import pallas as pl
from jax.experimental.pallas import tpu as pltpu


def _temporal_block_kernel(x_ref, mask_ref, w1_ref, b1_ref, w2_ref, b2_ref,
                           wd_ref, bd_ref, o_ref, *, K, dil):
    """Fused conv1+chomp+relu -> conv2+chomp+relu -> (+1x1 residual) -> relu.

    x_ref:    (C_in,  Nt)   Nt = Bt*L sequences packed along the lane axis
    mask_ref: (K, 1,  Nt)   mask[j] = 1.0 where (lane % L) >= j*dil
    w1_ref:   (C_out, K*C_in)  per-lag stacked conv1 weights
    w2_ref:   (C_out, K*C_out) per-lag stacked conv2 weights
    wd_ref:   (C_out, C_in)    1x1 residual conv (identity matrix if no downsample)
    biases:   (C_out, 1)
    o_ref:    (C_out, Nt)
    """
    x = x_ref[...]                                    # (C_in, Nt) f32

    def causal_im2col(v):
        # (C, Nt) -> (K*C, Nt): lag j holds v delayed by j*dil samples; the mask
        # zeroes both the causal left pad and the cross-sequence wrap of the roll.
        taps = [v]
        for j in range(1, K):
            shifted = pltpu.roll(v, shift=j * dil, axis=1)   # XLU, overlaps MXU/VPU
            taps.append(shifted * mask_ref[j])
        return jnp.concatenate(taps, axis=0)

    # conv1 (causal dilated) + bias + ReLU — single MXU call over the K-tap stack
    h1 = jnp.dot(w1_ref[...], causal_im2col(x),
                 preferred_element_type=jnp.float32) + b1_ref[...]
    h1 = jnp.maximum(h1, 0.0)
    # TODO(synk): dropout1 / dropout2 are identity here (eval-mode semantics).

    # conv2 (causal dilated) + bias + ReLU
    h2 = jnp.dot(w2_ref[...], causal_im2col(h1),
                 preferred_element_type=jnp.float32) + b2_ref[...]
    h2 = jnp.maximum(h2, 0.0)

    # residual path: 1x1 conv on the aligned, unpadded input tile
    res = jnp.dot(wd_ref[...], x, preferred_element_type=jnp.float32) + bd_ref[...]

    # final ReLU(out + res)
    o_ref[...] = jnp.maximum(h2 + res, 0.0)


def _pick_batch_tile(B, L):
    """How many length-L sequences to pack along the lane axis per grid step."""
    if B * L <= 1024:
        return B                         # everything fits one lane-dense tile
    bt = 128 // math.gcd(128, L)         # smallest Bt with (Bt*L) % 128 == 0
    while bt * L < 512 and bt * 2 <= B:  # grow toward >=512-lane stores
        bt *= 2
    return min(bt, B)


def temporal_block(x, w1, b1, w2, b2, wd, bd, *, kernel_size, dilation, padding):
    """x: (B, C_in, L) f32.  w1: (C_out, C_in, K), w2: (C_out, C_out, K),
    wd: (C_out, C_in) or None (identity residual), biases: (C_*,).
    Returns (B, C_out, L) f32."""
    B, C_in, L = x.shape
    C_out = w1.shape[0]
    K = kernel_size
    assert w1.shape[2] == K and w2.shape[2] == K
    # Chomp1d(pad) after symmetric padding == left-pad-only causal conv only if:
    assert padding == (K - 1) * dilation, "requires padding == (K-1)*dilation (stride=1)"

    if wd is None:                       # PyTorch identity residual (n_in == n_out)
        assert C_in == C_out
        wd = jnp.eye(C_out, dtype=jnp.float32)
        bd = jnp.zeros((C_out,), jnp.float32)

    # ---- lane-dense batch packing -----------------------------------------
    Bt = _pick_batch_tile(B, L)
    n_tiles = -(-B // Bt)
    Bpad = n_tiles * Bt
    if Bpad != B:
        x = jnp.concatenate([x, jnp.zeros((Bpad - B, C_in, L), x.dtype)], axis=0)
    Nt = Bt * L
    # pack sequences along the lane axis: (C_in, Bpad*L). Layout plumbing only.
    x2d = jnp.transpose(x, (1, 0, 2)).reshape(C_in, Bpad * L).astype(jnp.float32)

    # ---- per-lag im2col weight stacks (lag j = delay j*dil uses tap K-1-j) --
    w1s = jnp.transpose(w1[:, :, ::-1], (0, 2, 1)).reshape(C_out, K * C_in).astype(jnp.float32)
    w2s = jnp.transpose(w2[:, :, ::-1], (0, 2, 1)).reshape(C_out, K * C_out).astype(jnp.float32)
    b1c = jnp.reshape(b1, (C_out, 1)).astype(jnp.float32)
    b2c = jnp.reshape(b2, (C_out, 1)).astype(jnp.float32)
    bdc = jnp.reshape(bd, (C_out, 1)).astype(jnp.float32)
    wdm = jnp.reshape(wd, (C_out, C_in)).astype(jnp.float32)

    # ---- causal validity masks (host constants, identical for every tile) ---
    pos = np.arange(Nt) % L
    mask_np = np.stack([(pos >= j * dilation).astype(np.float32) for j in range(K)])
    mask = jnp.asarray(mask_np.reshape(K, 1, Nt))

    kernel = functools.partial(_temporal_block_kernel, K=K, dil=dilation)

    out2d = pl.pallas_call(
        kernel,
        out_shape=jax.ShapeDtypeStruct((C_out, Bpad * L), jnp.float32),
        grid_spec=pltpu.PrefetchScalarGridSpec(
            num_scalar_prefetch=0,
            grid=(n_tiles,),
            in_specs=[
                pl.BlockSpec((C_in, Nt), lambda i: (0, i)),
                pl.BlockSpec((K, 1, Nt), lambda i: (0, 0, 0)),
                pl.BlockSpec((C_out, K * C_in), lambda i: (0, 0)),
                pl.BlockSpec((C_out, 1), lambda i: (0, 0)),
                pl.BlockSpec((C_out, K * C_out), lambda i: (0, 0)),
                pl.BlockSpec((C_out, 1), lambda i: (0, 0)),
                pl.BlockSpec((C_out, C_in), lambda i: (0, 0)),
                pl.BlockSpec((C_out, 1), lambda i: (0, 0)),
            ],
            out_specs=pl.BlockSpec((C_out, Nt), lambda i: (0, i)),
        ),
        compiler_params=pltpu.CompilerParams(
            dimension_semantics=("parallel",)),
    )(x2d, mask, w1s, b1c, w2s, b2c, wdm, bdc)

    return out2d.reshape(C_out, Bpad, L).transpose(1, 0, 2)[:B]


# ---------------------------------------------------------------------------
# pure-JAX reference (for correctness check only; mirrors PyTorch conv+chomp)
# ---------------------------------------------------------------------------
def _ref_causal_conv(x, w, b, dilation, padding):
    # x: (B, C_in, L); w: (C_out, C_in, K); b: (C_out,)
    B, C_in, L = x.shape
    K = w.shape[2]
    xp = jnp.pad(x, ((0, 0), (0, 0), (padding, 0)))
    acc = jnp.zeros((B, w.shape[0], L), jnp.float32)
    for t in range(K):
        acc = acc + jnp.einsum('oc,bcl->bol', w[:, :, t],
                               xp[:, :, t * dilation: t * dilation + L])
    return acc + b[None, :, None]


def _ref_forward(x, w1, b1, w2, b2, wd, bd, *, dilation, padding):
    h1 = jax.nn.relu(_ref_causal_conv(x, w1, b1, dilation, padding))
    h2 = jax.nn.relu(_ref_causal_conv(h1, w2, b2, dilation, padding))
    res = jnp.einsum('oc,bcl->bol', wd, x) + bd[None, :, None]
    return jax.nn.relu(h2 + res)


if __name__ == "__main__":
    # module hyperparameters (n_inputs != n_outputs so the downsample path is active)
    n_inputs, n_outputs = 4, 8
    kernel_size, stride, dilation = 3, 1, 2
    padding = (kernel_size - 1) * dilation          # causal TCN padding = 4
    B, L = 2, 16

    key = jax.random.PRNGKey(0)
    ks = jax.random.split(key, 9)

    # weight_norm parameterization: w = g * v / ||v||  (norm over (in, k) per out-ch)
    v1 = 0.01 * jax.random.normal(ks[0], (n_outputs, n_inputs, kernel_size), jnp.float32)
    g1 = 1.0 + 0.1 * jax.random.normal(ks[1], (n_outputs, 1, 1), jnp.float32)
    w1_eff = g1 * v1 / jnp.sqrt(jnp.sum(v1 * v1, axis=(1, 2), keepdims=True))
    b1 = 0.01 * jax.random.normal(ks[2], (n_outputs,), jnp.float32)

    v2 = 0.01 * jax.random.normal(ks[3], (n_outputs, n_outputs, kernel_size), jnp.float32)
    g2 = 1.0 + 0.1 * jax.random.normal(ks[4], (n_outputs, 1, 1), jnp.float32)
    w2_eff = g2 * v2 / jnp.sqrt(jnp.sum(v2 * v2, axis=(1, 2), keepdims=True))
    b2 = 0.01 * jax.random.normal(ks[5], (n_outputs,), jnp.float32)

    wd = 0.01 * jax.random.normal(ks[6], (n_outputs, n_inputs), jnp.float32)  # 1x1 conv
    bd = 0.01 * jax.random.normal(ks[7], (n_outputs,), jnp.float32)

    x = jax.random.normal(ks[8], (B, n_inputs, L), jnp.float32)

    out = temporal_block(x, w1_eff, b1, w2_eff, b2, wd, bd,
                         kernel_size=kernel_size, dilation=dilation, padding=padding)
    out = jax.block_until_ready(out)

    ref = _ref_forward(x, w1_eff, b1, w2_eff, b2, wd, bd,
                       dilation=dilation, padding=padding)
    assert out.shape == (B, n_outputs, L)
    assert jnp.allclose(out, ref, rtol=1e-5, atol=1e-5), "mismatch vs JAX reference"

    print("KERNEL_OK")
</pallas_src>

<mosaic_0001>
module attributes {stable_mosaic.version = 11 : i64} {
  func.func @_temporal_block_kernel(%arg0: i32, %arg1: memref<4x32xf32, #tpu.memory_space<vmem>>, %arg2: memref<3x1x32xf32, #tpu.memory_space<vmem>>, %arg3: memref<8x12xf32, #tpu.memory_space<vmem>>, %arg4: memref<8x1xf32, #tpu.memory_space<vmem>>, %arg5: memref<8x24xf32, #tpu.memory_space<vmem>>, %arg6: memref<8x1xf32, #tpu.memory_space<vmem>>, %arg7: memref<8x4xf32, #tpu.memory_space<vmem>>, %arg8: memref<8x1xf32, #tpu.memory_space<vmem>>, %arg9: memref<8x32xf32, #tpu.memory_space<vmem>>) attributes {dimension_semantics = [#tpu.dimension_semantics<parallel>], iteration_bounds = array<i64: 1>, scalar_prefetch = 0 : i64, scratch_operands = 0 : i64, tpu.core_type = #tpu.core_type<tc>, window_params = [{transform_indices = @transform_0, window_bounds = array<i64: 4, 32>}, {pipeline_mode = #tpu.pipeline_mode<synchronous>, transform_indices = @transform_1, window_bounds = array<i64: 3, 1, 32>}, {pipeline_mode = #tpu.pipeline_mode<synchronous>, transform_indices = @transform_2, window_bounds = array<i64: 8, 12>}, {pipeline_mode = #tpu.pipeline_mode<synchronous>, transform_indices = @transform_3, window_bounds = array<i64: 8, 1>}, {pipeline_mode = #tpu.pipeline_mode<synchronous>, transform_indices = @transform_4, window_bounds = array<i64: 8, 24>}, {pipeline_mode = #tpu.pipeline_mode<synchronous>, transform_indices = @transform_5, window_bounds = array<i64: 8, 1>}, {pipeline_mode = #tpu.pipeline_mode<synchronous>, transform_indices = @transform_6, window_bounds = array<i64: 8, 4>}, {pipeline_mode = #tpu.pipeline_mode<synchronous>, transform_indices = @transform_7, window_bounds = array<i64: 8, 1>}, {transform_indices = @transform_8, window_bounds = array<i64: 8, 32>}]} {
    %c0 = arith.constant 0 : index
    %c0_0 = arith.constant 0 : index
    %0 = vector.load %arg1[%c0, %c0_0] : memref<4x32xf32, #tpu.memory_space<vmem>>, vector<4x32xf32>
    %c0_1 = arith.constant 0 : index
    %c0_2 = arith.constant 0 : index
    %1 = vector.load %arg3[%c0_1, %c0_2] : memref<8x12xf32, #tpu.memory_space<vmem>>, vector<8x12xf32>
    %c2_i32 = arith.constant 2 : i32
    %2 = tpu.dynamic_rotate %0 by %c2_i32 dim 1 : vector<4x32xf32>, i32 -> vector<4x32xf32>
    %c1 = arith.constant 1 : index
    %c0_3 = arith.constant 0 : index
    %c0_4 = arith.constant 0 : index
    %3 = vector.load %arg2[%c1, %c0_3, %c0_4] : memref<3x1x32xf32, #tpu.memory_space<vmem>>, vector<1x1x32xf32>
    %4 = vector.shape_cast %3 : vector<1x1x32xf32> to vector<1x32xf32>
    %5 = vector.broadcast %4 : vector<1x32xf32> to vector<4x32xf32>
    %6 = arith.mulf %2, %5 : vector<4x32xf32>
    %c4_i32 = arith.constant 4 : i32
    %7 = tpu.dynamic_rotate %0 by %c4_i32 dim 1 : vector<4x32xf32>, i32 -> vector<4x32xf32>
    %c2 = arith.constant 2 : index
    %c0_5 = arith.constant 0 : index
    %c0_6 = arith.constant 0 : index
    %8 = vector.load %arg2[%c2, %c0_5, %c0_6] : memref<3x1x32xf32, #tpu.memory_space<vmem>>, vector<1x1x32xf32>
    %9 = vector.shape_cast %8 : vector<1x1x32xf32> to vector<1x32xf32>
    %10 = vector.broadcast %9 : vector<1x32xf32> to vector<4x32xf32>
    %11 = arith.mulf %7, %10 : vector<4x32xf32>
    %12 = tpu.concatenate %0, %6, %11 in 0 : vector<4x32xf32>, vector<4x32xf32>, vector<4x32xf32> -> vector<12x32xf32>
    %cst = arith.constant dense<0.000000e+00> : vector<8x32xf32>
    %13 = tpu.matmul %1, %12, %cst {dimension_numbers = #tpu.dot_dimension_numbers<[1], [0], [0], [1], [0, 0, 1, 1], [], []>} : vector<8x12xf32>, vector<12x32xf32>, vector<8x32xf32> -> vector<8x32xf32>
    %c0_7 = arith.constant 0 : index
    %c0_8 = arith.constant 0 : index
    %14 = vector.load %arg4[%c0_7, %c0_8] : memref<8x1xf32, #tpu.memory_space<vmem>>, vector<8x1xf32>
    %15 = vector.broadcast %14 : vector<8x1xf32> to vector<8x32xf32>
    %16 = arith.addf %13, %15 : vector<8x32xf32>
    %cst_9 = arith.constant 0.000000e+00 : f32
    %17 = vector.broadcast %cst_9 : f32 to vector<8x32xf32>
    %18 = arith.maximumf %16, %17 : vector<8x32xf32>
    %c0_10 = arith.constant 0 : index
    %c0_11 = arith.constant 0 : index
    %19 = vector.load %arg5[%c0_10, %c0_11] : memref<8x24xf32, #tpu.memory_space<vmem>>, vector<8x24xf32>
    %c2_i32_12 = arith.constant 2 : i32
    %20 = tpu.dynamic_rotate %18 by %c2_i32_12 dim 1 : vector<8x32xf32>, i32 -> vector<8x32xf32>
    %c1_13 = arith.constant 1 : index
    %c0_14 = arith.constant 0 : index
    %c0_15 = arith.constant 0 : index
    %21 = vector.load %arg2[%c1_13, %c0_14, %c0_15] : memref<3x1x32xf32, #tpu.memory_space<vmem>>, vector<1x1x32xf32>
    %22 = vector.shape_cast %21 : vector<1x1x32xf32> to vector<1x32xf32>
    %23 = vector.broadcast %22 : vector<1x32xf32> to vector<8x32xf32>
    %24 = arith.mulf %20, %23 : vector<8x32xf32>
    %c4_i32_16 = arith.constant 4 : i32
    %25 = tpu.dynamic_rotate %18 by %c4_i32_16 dim 1 : vector<8x32xf32>, i32 -> vector<8x32xf32>
    %c2_17 = arith.constant 2 : index
    %c0_18 = arith.constant 0 : index
    %c0_19 = arith.constant 0 : index
    %26 = vector.load %arg2[%c2_17, %c0_18, %c0_19] : memref<3x1x32xf32, #tpu.memory_space<vmem>>, vector<1x1x32xf32>
    %27 = vector.shape_cast %26 : vector<1x1x32xf32> to vector<1x32xf32>
    %28 = vector.broadcast %27 : vector<1x32xf32> to vector<8x32xf32>
    %29 = arith.mulf %25, %28 : vector<8x32xf32>
    %30 = tpu.concatenate %18, %24, %29 in 0 : vector<8x32xf32>, vector<8x32xf32>, vector<8x32xf32> -> vector<24x32xf32>
    %cst_20 = arith.constant dense<0.000000e+00> : vector<8x32xf32>
    %31 = tpu.matmul %19, %30, %cst_20 {dimension_numbers = #tpu.dot_dimension_numbers<[1], [0], [0], [1], [0, 0, 1, 1], [], []>} : vector<8x24xf32>, vector<24x32xf32>, vector<8x32xf32> -> vector<8x32xf32>
    %c0_21 = arith.constant 0 : index
    %c0_22 = arith.constant 0 : index
    %32 = vector.load %arg6[%c0_21, %c0_22] : memref<8x1xf32, #tpu.memory_space<vmem>>, vector<8x1xf32>
    %33 = vector.broadcast %32 : vector<8x1xf32> to vector<8x32xf32>
    %34 = arith.addf %31, %33 : vector<8x32xf32>
    %cst_23 = arith.constant 0.000000e+00 : f32
    %35 = vector.broadcast %cst_23 : f32 to vector<8x32xf32>
    %36 = arith.maximumf %34, %35 : vector<8x32xf32>
    %c0_24 = arith.constant 0 : index
    %c0_25 = arith.constant 0 : index
    %37 = vector.load %arg7[%c0_24, %c0_25] : memref<8x4xf32, #tpu.memory_space<vmem>>, vector<8x4xf32>
    %cst_26 = arith.constant dense<0.000000e+00> : vector<8x32xf32>
    %38 = tpu.matmul %37, %0, %cst_26 {dimension_numbers = #tpu.dot_dimension_numbers<[1], [0], [0], [1], [0, 0, 1, 1], [], []>} : vector<8x4xf32>, vector<4x32xf32>, vector<8x32xf32> -> vector<8x32xf32>
    %c0_27 = arith.constant 0 : index
    %c0_28 = arith.constant 0 : index
    %39 = vector.load %arg8[%c0_27, %c0_28] : memref<8x1xf32, #tpu.memory_space<vmem>>, vector<8x1xf32>
    %40 = vector.broadcast %39 : vector<8x1xf32> to vector<8x32xf32>
    %41 = arith.addf %38, %40 : vector<8x32xf32>
    %42 = arith.addf %36, %41 : vector<8x32xf32>
    %cst_29 = arith.constant 0.000000e+00 : f32
    %43 = vector.broadcast %cst_29 : f32 to vector<8x32xf32>
    %44 = arith.maximumf %42, %43 : vector<8x32xf32>
    %c0_30 = arith.constant 0 : index
    %c0_31 = arith.constant 0 : index
    %45 = vector.load %arg9[%c0_30, %c0_31] : memref<8x32xf32, #tpu.memory_space<vmem>>, vector<8x32xf32>
    tpu.vector_store %arg9[%c0_30, %c0_31], %44 {strides = array<i32>} : memref<8x32xf32, #tpu.memory_space<vmem>>, vector<8x32xf32>,
    return
  }
  func.func @transform_0(%arg0: i32) -> (i32, i32) {
    %c0_i32 = arith.constant 0 : i32
    %c0_i32_0 = arith.constant 0 : i32
    return %c0_i32, %arg0 : i32, i32
  }
  func.func @transform_1(%arg0: i32) -> (i32, i32, i32) {
    %c0_i32 = arith.constant 0 : i32
    %c0_i32_0 = arith.constant 0 : i32
    %c0_i32_1 = arith.constant 0 : i32
    %c0_i32_2 = arith.constant 0 : i32
    return %c0_i32, %c0_i32_0, %c0_i32_1 : i32, i32, i32
  }
  func.func @transform_2(%arg0: i32) -> (i32, i32) {
    %c0_i32 = arith.constant 0 : i32
    %c0_i32_0 = arith.constant 0 : i32
    %c0_i32_1 = arith.constant 0 : i32
    return %c0_i32, %c0_i32_0 : i32, i32
  }
  func.func @transform_3(%arg0: i32) -> (i32, i32) {
    %c0_i32 = arith.constant 0 : i32
    %c0_i32_0 = arith.constant 0 : i32
    %c0_i32_1 = arith.constant 0 : i32
    return %c0_i32, %c0_i32_0 : i32, i32
  }
  func.func @transform_4(%arg0: i32) -> (i32, i32) {
    %c0_i32 = arith.constant 0 : i32
    %c0_i32_0 = arith.constant 0 : i32
    %c0_i32_1 = arith.constant 0 : i32
    return %c0_i32, %c0_i32_0 : i32, i32
  }
  func.func @transform_5(%arg0: i32) -> (i32, i32) {
    %c0_i32 = arith.constant 0 : i32
    %c0_i32_0 = arith.constant 0 : i32
    %c0_i32_1 = arith.constant 0 : i32
    return %c0_i32, %c0_i32_0 : i32, i32
  }
  func.func @transform_6(%arg0: i32) -> (i32, i32) {
    %c0_i32 = arith.constant 0 : i32
    %c0_i32_0 = arith.constant 0 : i32
    %c0_i32_1 = arith.constant 0 : i32
    return %c0_i32, %c0_i32_0 : i32, i32
  }
  func.func @transform_7(%arg0: i32) -> (i32, i32) {
    %c0_i32 = arith.constant 0 : i32
    %c0_i32_0 = arith.constant 0 : i32
    %c0_i32_1 = arith.constant 0 : i32
    return %c0_i32, %c0_i32_0 : i32, i32
  }
  func.func @transform_8(%arg0: i32) -> (i32, i32) {
    %c0_i32 = arith.constant 0 : i32
    %c0_i32_0 = arith.constant 0 : i32
    return %c0_i32, %arg0 : i32, i32
  }
}

</mosaic_0001>

<llo_original>
// kernel: tpu_custom_call.1
$region0: #{tpu_custom_call.1}
  #allocation0 [shape = 'u32[]', space=smem, size = 0x4, offset = 0x4, fixed_abs, tag = 'smem constant byte address 0x4 - core index']
  #allocation1 [shape = 'u32[144,128]{1,0:T(1,128)}', space=vmem, size = 0x12000, scoped, tag = 'internal scratch']
  %s0 = inlined_call_operand.vmem [shape: f32[4,32], index: 0, kind: input, shape index: {}]
  %s1 = inlined_call_operand.vmem [shape: f32[3,1,32], index: 1, kind: input, shape index: {}]
  %s2 = inlined_call_operand.vmem [shape: f32[8,12], index: 2, kind: input, shape index: {}]
  %s3 = inlined_call_operand.vmem [shape: f32[8,1], index: 3, kind: input, shape index: {}]
  %s4 = inlined_call_operand.vmem [shape: f32[8,24], index: 4, kind: input, shape index: {}]
  %s5 = inlined_call_operand.vmem [shape: f32[8,1], index: 5, kind: input, shape index: {}]
  %s6 = inlined_call_operand.vmem [shape: f32[8,4], index: 6, kind: input, shape index: {}]
  %s7 = inlined_call_operand.vmem [shape: f32[8,1], index: 7, kind: input, shape index: {}]
  %s8 = inlined_call_operand.hbm [shape: f32[8,32], index: 8, kind: output, shape index: {}]
  %s9 = sld [smem:[#allocation0]]
  $region42: #{tpu_custom_call.1} parent=0
    _
  %s11 = ssub.s32 1, %s9
  %s12 = scalar_select 0, %s11, %s9
  $region1: #{tpu_custom_call.1} parent=0
    #allocation2 [shape = 'u8[4096]{0}', space=vmem, size = 0x1000, scoped, tag = 'output window, operand 0, single buffered']
    #allocation3 [shape = 's32[1]{0}', space=sflag, size = 0x4, scoped, tag = 'scoped memory for tpu_custom_call.1']
    %13 = vsyncpa [#allocation3], 0
    // Predicated region
    $region2: #{tpu_custom_call.1} parent=1 // pred_check
      _
    $region3: #{tpu_custom_call.1} parent=1 // pred_check_branch
      %15 = sbr.rel (0) target = $region5
    $region4: #{tpu_custom_call.1} parent=1 // pred_region
      _
    $region5: #{tpu_custom_call.1} parent=1 // pred_fallthru
      _
    // Predicated region
    $region6: #{tpu_custom_call.1} parent=1 // pred_check
      _
    $region7: #{tpu_custom_call.1} parent=1 // pred_check_branch
      %17 = sbr.rel (0) target = $region9
    $region8: #{tpu_custom_call.1} parent=1 // pred_region
      _
    $region9: #{tpu_custom_call.1} parent=1 // pred_fallthru
      _
    // Predicated region
    $region10: #{tpu_custom_call.1} parent=1 // pred_check
      _
    $region11: #{tpu_custom_call.1} parent=1 // pred_check_branch
      %19 = sbr.rel (0) target = $region13
    $region12: #{tpu_custom_call.1} parent=1 // pred_region
      _
    $region13: #{tpu_custom_call.1} parent=1 // pred_fallthru
      _
    // Predicated region
    $region14: #{tpu_custom_call.1} parent=1 // pred_check
      _
    $region15: #{tpu_custom_call.1} parent=1 // pred_check_branch
      %21 = sbr.rel (0) target = $region17
    $region16: #{tpu_custom_call.1} parent=1 // pred_region
      _
    $region17: #{tpu_custom_call.1} parent=1 // pred_fallthru
      _
    // Predicated region
    $region18: #{tpu_custom_call.1} parent=1 // pred_check
      _
    $region19: #{tpu_custom_call.1} parent=1 // pred_check_branch
      %23 = sbr.rel (0) target = $region21
    $region20: #{tpu_custom_call.1} parent=1 // pred_region
      _
    $region21: #{tpu_custom_call.1} parent=1 // pred_fallthru
      _
    // Predicated region
    $region22: #{tpu_custom_call.1} parent=1 // pred_check
      _
    $region23: #{tpu_custom_call.1} parent=1 // pred_check_branch
      %25 = sbr.rel (0) target = $region25
    $region24: #{tpu_custom_call.1} parent=1 // pred_region
      _
    $region25: #{tpu_custom_call.1} parent=1 // pred_fallthru
      _
    // Predicated region
    $region26: #{tpu_custom_call.1} parent=1 // pred_check
      _
    $region27: #{tpu_custom_call.1} parent=1 // pred_check_branch
      %27 = sbr.rel (0) target = $region29
    $region28: #{tpu_custom_call.1} parent=1 // pred_region
      _
    $region29: #{tpu_custom_call.1} parent=1 // pred_fallthru
      _
    // Predicated region
    $region30: #{tpu_custom_call.1} parent=1 // pred_check
      _
    $region31: #{tpu_custom_call.1} parent=1 // pred_check_branch
      %29 = sbr.rel (0) target = $region33
    $region32: #{tpu_custom_call.1} parent=1 // pred_region
      _
    $region33: #{tpu_custom_call.1} parent=1 // pred_fallthru
      _
    %v30 = vld [vmem:[%s0] sm:$0xf]
    %v31 = vld [vmem:[%s2] sm:$0xff]
    %vm32 = vcmask 1047808
    %33 = vrot.lane.b32.xlu0 %v30, 32
    %v34 = vpop.permute.xlu0 %33
    %v35 = vsel %vm32, %v34, %v30
    %36 = vrot.lane.b32.xlu0 %v35, 32
    %v37 = vpop.permute.xlu0 %36
    %v38 = vsel %vm32, %v37, %v30
    %s39 = scalar_lea.vmem %s1, 1
    %v40 = vld [vmem:[%s39] sm:$0x1]
    %v42 = vlaneseq
    %v43 = vshrl.u32 %v42, 7
    %v44 = vsub.s32 0, %v43
    %v45 = vrot.slane %v40, %v44
    %46 = vrot.lane.b32.xlu0 %v45, 30
    %v47 = vpop.permute.xlu0 %46
    %v49 = vmul.f32 %v38, %v47
    %s50 = scalar_lea.vmem %s1, 2
    %v51 = vld [vmem:[%s50] sm:$0x1]
    %v53 = vlaneseq
    %v54 = vshrl.u32 %v53, 7
    %v55 = vsub.s32 0, %v54
    %v56 = vrot.slane %v51, %v55
    %57 = vrot.lane.b32.xlu0 %v56, 28
    %v58 = vpop.permute.xlu0 %57
    %v60 = vmul.f32 %v38, %v58
    %v62 = vrot.slane %v49, 4
    %63 = vrot.lane.b32.xlu0 %v62, 98
    %v64 = vpop.permute.xlu0 %63
    %67 = vrot.lane.b32.xlu0 %v60, 100
    %v68 = vpop.permute.xlu0 %67
    %vm69 = vcmask 1043456
    %v70 = vsel %vm69, %v30, %v64
    %v71 = vld [vmem:[%s3] sm:$0xff]
    %73 = vset.pattern.permute.xlu0 0
    %74 = vperm.xlu0 %73, %v71
    %v75 = vpop.permute.xlu0 %74
    %vm77 = vcmask 97280
    %v79 = vsel %vm77, %v31, 0
    %v81 = vsel %vm69, %v68, 0
    %83 = vmatprep.subr.mxu0 0.0
    %84 = vmatpush1.msra.mxu0 %v70
    %85 = vmatprep.subr.mxu0 0.0
    %86 = vmatpush1.msra.mxu0 %v81
    %87 = vmatprep.subr.mxu0 0.0
    %88 = vmatpush1.msra.mxu0 0.0
    %89 = vmatprep.subr.mxu0 0.0
    %90 = vmatpush1.msra.mxu0 0.0
    %91 = vmatprep.subr.mxu0 0.0
    %92 = vmatpush1.msra.mxu0 0.0
    %93 = vmatprep.subr.mxu0 0.0
    %94 = vmatpush1.msra.mxu0 0.0
    %95 = vmatprep.subr.mxu0 0.0
    %96 = vmatpush1.msra.mxu0 0.0
    %97 = vmatprep.subr.mxu0 0.0
    %98 = vmatpush1.msra.mxu0 0.0
    %99 = vmatprep.subr.mxu0 0.0
    %100 = vmatpush1.msra.mxu0 0.0
    %101 = vmatprep.subr.mxu0 0.0
    %102 = vmatpush1.msra.mxu0 0.0
    %103 = vmatprep.subr.mxu0 0.0
    %104 = vmatpush1.msra.mxu0 0.0
    %105 = vmatprep.subr.mxu0 0.0
    %106 = vmatpush1.msra.mxu0 0.0
    %107 = vmatprep.subr.mxu0 0.0
    %108 = vmatpush1.msra.mxu0 0.0
    %109 = vmatprep.subr.mxu0 0.0
    %110 = vmatpush1.msra.mxu0 0.0
    %111 = vmatprep.subr.mxu0 0.0
    %112 = vmatpush1.msra.mxu0 0.0
    %113 = vmatprep.subr.mxu0 0.0
    %114 = vmatpush1.msra.mxu0 0.0
    %115 = vmatprep.subr.mxu0 0.0
    %116 = vmatpush1.msra.mxu0 0.0
    %117 = vmatprep.subr.mxu0 0.0
    %118 = vmatpush1.msra.mxu0 0.0
    %119 = vmatprep.subr.mxu0 0.0
    %120 = vmatpush1.msra.mxu0 0.0
    %121 = vmatprep.subr.mxu0 0.0
    %122 = vmatpush1.msra.mxu0 0.0
    %123 = vmatprep.subr.mxu0 0.0
    %124 = vmatpush1.msra.mxu0 0.0
    %125 = vmatprep.subr.mxu0 0.0
    %126 = vmatpush1.msra.mxu0 0.0
    %127 = vmatprep.subr.mxu0 0.0
    %128 = vmatpush1.msra.mxu0 0.0
    %129 = vmatprep.subr.mxu0 0.0
    %130 = vmatpush1.msra.mxu0 0.0
    %131 = vmatprep.subr.mxu0 0.0
    %132 = vmatpush1.msra.mxu0 0.0
    %133 = vmatprep.subr.mxu0 0.0
    %134 = vmatpush1.msra.mxu0 0.0
    %135 = vmatprep.subr.mxu0 0.0
    %136 = vmatpush1.msra.mxu0 0.0
    %137 = vmatprep.subr.mxu0 0.0
    %138 = vmatpush1.msra.mxu0 0.0
    %139 = vmatprep.subr.mxu0 0.0
    %140 = vmatpush1.msra.mxu0 0.0
    %141 = vmatprep.subr.mxu0 0.0
    %142 = vmatpush1.msra.mxu0 0.0
    %143 = vmatprep.subr.mxu0 0.0
    %144 = vmatpush1.msra.mxu0 0.0
    %145 = vmatprep.subr.mxu0 0.0
    %146 = vmatpush1.msra.mxu0 0.0
    %147 = vmatprep.mubr.f32.mxu0 0.0
    %148 = vmatmul.mubr.f32.gmra.mrb[0].mxu0 %v79
    %v149 = vpop.f32.mrb[0].mxu0
    %v150 = vadd.f32 %v75, %v149
    %v151 = vpop.f32.mrb[0].mxu0
    %152 = vdwg.mxu0
    %v153 = vmax.f32 %v150, 0.0
    %v154 = vld [vmem:[%s4] sm:$0xff]
    %155 = vrot.lane.b32.xlu0 %v153, 32
    %v156 = vpop.permute.xlu0 %155
    %v157 = vsel %vm32, %v156, %v153
    %158 = vrot.lane.b32.xlu0 %v157, 32
    %v159 = vpop.permute.xlu0 %158
    %v160 = vsel %vm32, %v159, %v153
    %v161 = vmul.f32 %v160, %v47
    %v162 = vmul.f32 %v160, %v58
    %164 = vrot.lane.b32.xlu0 %v161, 98
    %v165 = vpop.permute.xlu0 %164
    %168 = vrot.lane.b32.xlu0 %v162, 100
    %v169 = vpop.permute.xlu0 %168
    %v171 = vld [vmem:[%s5] sm:$0xff]
    %173 = vset.pattern.permute.xlu0 0
    %174 = vperm.xlu0 %173, %v171
    %v175 = vpop.permute.xlu0 %174
    %vm177 = vcmask 195584
    %v179 = vsel %vm177, %v154, 0
    %181 = vmatprep.subr.mxu0 0.0
    %182 = vmatpush1.msra.mxu0 %v153
    %183 = vmatprep.subr.mxu0 0.0
    %184 = vmatpush1.msra.mxu0 %v165
    %185 = vmatprep.subr.mxu0 0.0
    %186 = vmatpush1.msra.mxu0 %v169
    %187 = vmatprep.subr.mxu0 0.0
    %188 = vmatpush1.msra.mxu0 0.0
    %189 = vmatprep.subr.mxu0 0.0
    %190 = vmatpush1.msra.mxu0 0.0
    %191 = vmatprep.subr.mxu0 0.0
    %192 = vmatpush1.msra.mxu0 0.0
    %193 = vmatprep.subr.mxu0 0.0
    %194 = vmatpush1.msra.mxu0 0.0
    %195 = vmatprep.subr.mxu0 0.0
    %196 = vmatpush1.msra.mxu0 0.0
    %197 = vmatprep.subr.mxu0 0.0
    %198 = vmatpush1.msra.mxu0 0.0
    %199 = vmatprep.subr.mxu0 0.0
    %200 = vmatpush1.msra.mxu0 0.0
    %201 = vmatprep.subr.mxu0 0.0
    %202 = vmatpush1.msra.mxu0 0.0
    %203 = vmatprep.subr.mxu0 0.0
    %204 = vmatpush1.msra.mxu0 0.0
    %205 = vmatprep.subr.mxu0 0.0
    %206 = vmatpush1.msra.mxu0 0.0
    %207 = vmatprep.subr.mxu0 0.0
    %208 = vmatpush1.msra.mxu0 0.0
    %209 = vmatprep.subr.mxu0 0.0
    %210 = vmatpush1.msra.mxu0 0.0
    %211 = vmatprep.subr.mxu0 0.0
    %212 = vmatpush1.msra.mxu0 0.0
    %213 = vmatprep.subr.mxu0 0.0
    %214 = vmatpush1.msra.mxu0 0.0
    %215 = vmatprep.subr.mxu0 0.0
    %216 = vmatpush1.msra.mxu0 0.0
    %217 = vmatprep.subr.mxu0 0.0
    %218 = vmatpush1.msra.mxu0 0.0
    %219 = vmatprep.subr.mxu0 0.0
    %220 = vmatpush1.msra.mxu0 0.0
    %221 = vmatprep.subr.mxu0 0.0
    %222 = vmatpush1.msra.mxu0 0.0
    %223 = vmatprep.subr.mxu0 0.0
    %224 = vmatpush1.msra.mxu0 0.0
    %225 = vmatprep.subr.mxu0 0.0
    %226 = vmatpush1.msra.mxu0 0.0
    %227 = vmatprep.subr.mxu0 0.0
    %228 = vmatpush1.msra.mxu0 0.0
    %229 = vmatprep.subr.mxu0 0.0
    %230 = vmatpush1.msra.mxu0 0.0
    %231 = vmatprep.subr.mxu0 0.0
    %232 = vmatpush1.msra.mxu0 0.0
    %233 = vmatprep.subr.mxu0 0.0
    %234 = vmatpush1.msra.mxu0 0.0
    %235 = vmatprep.subr.mxu0 0.0
    %236 = vmatpush1.msra.mxu0 0.0
    %237 = vmatprep.subr.mxu0 0.0
    %238 = vmatpush1.msra.mxu0 0.0
    %239 = vmatprep.subr.mxu0 0.0
    %240 = vmatpush1.msra.mxu0 0.0
    %241 = vmatprep.subr.mxu0 0.0
    %242 = vmatpush1.msra.mxu0 0.0
    %243 = vmatprep.subr.mxu0 0.0
    %244 = vmatpush1.msra.mxu0 0.0
    %245 = vmatprep.mubr.f32.mxu0 0.0
    %246 = vmatmul.mubr.f32.gmra.mrb[0].mxu0 %v179
    %v247 = vpop.f32.mrb[0].mxu0
    %v248 = vadd.f32 %v175, %v247
    %v249 = vpop.f32.mrb[0].mxu0
    %250 = vdwg.mxu0
    %v251 = vmax.f32 %v248, 0.0
    %v252 = vld [vmem:[%s6] sm:$0xff]
    %v253 = vld [vmem:[%s7] sm:$0xff]
    %255 = vset.pattern.permute.xlu0 0
    %256 = vperm.xlu0 %255, %v253
    %v257 = vpop.permute.xlu0 %256
    %vm259 = vcmask 31744
    %v261 = vsel %vm259, %v252, 0
    %v264 = vsel %vm69, %v30, 0
    %266 = vmatprep.subr.mxu0 0.0
    %267 = vmatpush1.msra.mxu0 %v264
    %268 = vmatprep.subr.mxu0 0.0
    %269 = vmatpush1.msra.mxu0 0.0
    %270 = vmatprep.subr.mxu0 0.0
    %271 = vmatpush1.msra.mxu0 0.0
    %272 = vmatprep.subr.mxu0 0.0
    %273 = vmatpush1.msra.mxu0 0.0
    %274 = vmatprep.subr.mxu0 0.0
    %275 = vmatpush1.msra.mxu0 0.0
    %276 = vmatprep.subr.mxu0 0.0
    %277 = vmatpush1.msra.mxu0 0.0
    %278 = vmatprep.subr.mxu0 0.0
    %279 = vmatpush1.msra.mxu0 0.0
    %280 = vmatprep.subr.mxu0 0.0
    %281 = vmatpush1.msra.mxu0 0.0
    %282 = vmatprep.subr.mxu0 0.0
    %283 = vmatpush1.msra.mxu0 0.0
    %284 = vmatprep.subr.mxu0 0.0
    %285 = vmatpush1.msra.mxu0 0.0
    %286 = vmatprep.subr.mxu0 0.0
    %287 = vmatpush1.msra.mxu0 0.0
    %288 = vmatprep.subr.mxu0 0.0
    %289 = vmatpush1.msra.mxu0 0.0
    %290 = vmatprep.subr.mxu0 0.0
    %291 = vmatpush1.msra.mxu0 0.0
    %292 = vmatprep.subr.mxu0 0.0
    %293 = vmatpush1.msra.mxu0 0.0
    %294 = vmatprep.subr.mxu0 0.0
    %295 = vmatpush1.msra.mxu0 0.0
    %296 = vmatprep.subr.mxu0 0.0
    %297 = vmatpush1.msra.mxu0 0.0
    %298 = vmatprep.subr.mxu0 0.0
    %299 = vmatpush1.msra.mxu0 0.0
    %300 = vmatprep.subr.mxu0 0.0
    %301 = vmatpush1.msra.mxu0 0.0
    %302 = vmatprep.subr.mxu0 0.0
    %303 = vmatpush1.msra.mxu0 0.0
    %304 = vmatprep.subr.mxu0 0.0
    %305 = vmatpush1.msra.mxu0 0.0
    %306 = vmatprep.subr.mxu0 0.0
    %307 = vmatpush1.msra.mxu0 0.0
    %308 = vmatprep.subr.mxu0 0.0
    %309 = vmatpush1.msra.mxu0 0.0
    %310 = vmatprep.subr.mxu0 0.0
    %311 = vmatpush1.msra.mxu0 0.0
    %312 = vmatprep.subr.mxu0 0.0
    %313 = vmatpush1.msra.mxu0 0.0
    %314 = vmatprep.subr.mxu0 0.0
    %315 = vmatpush1.msra.mxu0 0.0
    %316 = vmatprep.subr.mxu0 0.0
    %317 = vmatpush1.msra.mxu0 0.0
    %318 = vmatprep.subr.mxu0 0.0
    %319 = vmatpush1.msra.mxu0 0.0
    %320 = vmatprep.subr.mxu0 0.0
    %321 = vmatpush1.msra.mxu0 0.0
    %322 = vmatprep.subr.mxu0 0.0
    %323 = vmatpush1.msra.mxu0 0.0
    %324 = vmatprep.subr.mxu0 0.0
    %325 = vmatpush1.msra.mxu0 0.0
    %326 = vmatprep.subr.mxu0 0.0
    %327 = vmatpush1.msra.mxu0 0.0
    %328 = vmatprep.subr.mxu0 0.0
    %329 = vmatpush1.msra.mxu0 0.0
    %330 = vmatprep.mubr.f32.mxu0 0.0
    %331 = vmatmul.mubr.f32.gmra.mrb[0].mxu0 %v261
    %v332 = vpop.f32.mrb[0].mxu0
    %v333 = vadd.f32 %v257, %v332
    %v334 = vpop.f32.mrb[0].mxu0
    %335 = vdwg.mxu0
    %v336 = vadd.f32 %v251, %v333
    %v337 = vmax.f32 %v336, 0.0
    %vm338 = vcmask 261120
    %339 = vst.msk [vmem:[#allocation2] sm:$0xff] %vm338, %v337
    // Predicated region
    $region34: #{tpu_custom_call.1} parent=1 // pred_check
      _
    $region35: #{tpu_custom_call.1} parent=1 // pred_check_branch
      %341 = sbr.rel (0) target = $region37
    $region36: #{tpu_custom_call.1} parent=1 // pred_region
      %s343 = ssub.s32 128, 128
      %344 = vsyncadd [#allocation3], %s343
      %s346 = sshll.u32 [#allocation2], 4
      %s347 = int_to_ptr.vmem [resolvable:$true] %s346
      %349 = dma.vmem_to_hbm [thread:$0]  %s347, 128, %s8, [#allocation3]
    $region37: #{tpu_custom_call.1} parent=1 // pred_fallthru
      _
    // Predicated region
    $region38: #{tpu_custom_call.1} parent=1 // pred_check
      _
    $region39: #{tpu_custom_call.1} parent=1 // pred_check_branch
      %351 = sbr.rel (0) target = $region41
    $region40: #{tpu_custom_call.1} parent=1 // pred_region
      %352 = dma.done [#allocation3], 128
    $region41: #{tpu_custom_call.1} parent=1 // pred_fallthru
      _
    %353 = vsyncpa [#allocation3], 1

</llo_original>
